<compile_context>
chip_gen: v7x
topology: tpu7x:2x2x1
jax: 0.10.0
libtpu: 0.0.40
codegen_flags: <defaults>
</compile_context>

<pallas_src>
import jax
import jax.numpy as jnp
from jax.experimental import pallas as pl
from jax.experimental.pallas import tpu as pltpu


def _round_up(x, m):
    return ((x + m - 1) // m) * m


def _block_diag(block, fold):
    """(in, out) -> (fold*in, fold*out) block-diagonal with `fold` copies."""
    if fold == 1:
        return block
    in_d, out_d = block.shape
    eye = jnp.eye(fold, dtype=block.dtype)
    return jnp.einsum("fg,io->figo", eye, block).reshape(fold * in_d, fold * out_d)


def vnet_kernel(x_ref, w1_ref, b1_ref, w2_ref, b2_ref, w3_ref, b3_ref, o_ref):
    # x tile: (rt_f, fold*S), lane-dense.  Weights are fold-block-diagonal, so
    # every layer is a plain A(M,K)@B(K,N) matmul (no transpose needed) and the
    # per-row scalars come out as a (rt_f, fold) slab.
    x = x_ref[...]

    h1 = jnp.dot(x, w1_ref[...], preferred_element_type=jnp.float32) + b1_ref[...]
    h1 = jnp.maximum(h1, 0.0)

    h2 = jnp.dot(h1.astype(w2_ref.dtype), w2_ref[...],
                 preferred_element_type=jnp.float32) + b2_ref[...]
    h2 = jnp.maximum(h2, 0.0)

    v = jnp.dot(h2.astype(w3_ref.dtype), w3_ref[...],
                preferred_element_type=jnp.float32) + b3_ref[0]

    o_ref[...] = v.astype(o_ref.dtype)


def v_net_forward(states, params, *, row_tile=8192, compute_dtype=None,
                  vmem_budget_bytes=12 * 1024 * 1024):
    """states: (..., state_dim) -> (..., 1). Matches PyTorch V_Net.forward."""
    w1, b1, w2, b2, w3, b3 = params
    state_dim = states.shape[-1]
    embed_dim = w1.shape[0]
    assert w1.shape == (embed_dim, state_dim)

    out_dtype = states.dtype
    if compute_dtype is None:
        compute_dtype = states.dtype

    # Fold factor: pack `fold` logical rows into the 128-wide lane axis
    # (fold=4 for the default 32-dim state / 32-dim embedding).
    fold = max(1, 128 // max(state_dim, embed_dim))

    lead_shape = states.shape[:-1]
    x2d = states.reshape(-1, state_dim)
    rows = x2d.shape[0]

    gran = fold * 8                          # folded rows come in sublane groups of 8
    rows_r = _round_up(max(rows, 1), gran)

    # --- row-tile selection (in logical rows) -------------------------------
    rt = _round_up(min(row_tile, rows_r), gran)
    # VMEM budget: x double-buffer + f32 h1/h2 temporaries + output double-buffer.
    csz = jnp.dtype(compute_dtype).itemsize
    osz = jnp.dtype(out_dtype).itemsize
    bytes_per_frow = (2 * fold * state_dim * csz
                      + 2 * fold * embed_dim * 4
                      + 2 * fold * osz)
    cap_frows = max(8, (vmem_budget_bytes // bytes_per_frow) // 8 * 8)
    rt = max(gran, min(rt, cap_frows * fold))
    # v7x has 2 TensorCores: make sure the "parallel" grid axis has >= 2 steps
    # whenever the row count allows (free on single-TC v5e/v6e: tiny extra step).
    if rows_r >= 2 * gran and rt > rows_r // 2:
        rt = _round_up(pl.cdiv(rows_r, 2), gran)

    num_tiles = pl.cdiv(rows_r, rt)
    rows_pad = num_tiles * rt
    rt_f = rt // fold

    if rows_pad != rows:
        x2d = jnp.pad(x2d, ((0, rows_pad - rows), (0, 0)))
    # Free, row-major-contiguous fold: (rows_pad, S) -> (rows_pad/fold, fold*S).
    xf = x2d.reshape(rows_pad // fold, fold * state_dim).astype(compute_dtype)

    # Pack parameters once (tiny): fold-block-diagonal weights, fold-tiled
    # biases.  Biases stay f32 -- all post-matmul math is f32 even in bf16 mode.
    w1bd = _block_diag(jnp.transpose(w1), fold).astype(compute_dtype)  # (f*S, f*E)
    w2bd = _block_diag(jnp.transpose(w2), fold).astype(compute_dtype)  # (f*E, f*E)
    w3bd = _block_diag(jnp.transpose(w3), fold).astype(compute_dtype)  # (f*E, f)
    b1t = jnp.tile(b1.astype(jnp.float32).reshape(1, -1), (1, fold))   # (1, f*E)
    b2t = jnp.tile(b2.astype(jnp.float32).reshape(1, -1), (1, fold))   # (1, f*E)
    b3s = b3.astype(jnp.float32).reshape(1)                            # SMEM scalar

    param_bytes = sum(int(p.size) * p.dtype.itemsize
                      for p in (w1bd, b1t, w2bd, b2t, w3bd, b3s))
    cost = pl.CostEstimate(
        flops=2 * rows_pad * (state_dim * embed_dim + embed_dim * embed_dim + embed_dim),
        transcendentals=0,
        bytes_accessed=int(xf.size) * xf.dtype.itemsize + rows_pad * osz + param_bytes,
    )

    out = pl.pallas_call(
        vnet_kernel,
        out_shape=jax.ShapeDtypeStruct((num_tiles * rt_f, fold), out_dtype),
        grid_spec=pl.GridSpec(
            grid=(num_tiles,),
            in_specs=[
                pl.BlockSpec((rt_f, fold * state_dim), lambda i: (i, 0)),        # x tile
                pl.BlockSpec((fold * state_dim, fold * embed_dim), lambda i: (0, 0)),
                pl.BlockSpec((1, fold * embed_dim), lambda i: (0, 0)),
                pl.BlockSpec((fold * embed_dim, fold * embed_dim), lambda i: (0, 0)),
                pl.BlockSpec((1, fold * embed_dim), lambda i: (0, 0)),
                pl.BlockSpec((fold * embed_dim, fold), lambda i: (0, 0)),
                pl.BlockSpec(memory_space=pltpu.MemorySpace.SMEM),               # b3 scalar
            ],
            out_specs=pl.BlockSpec((rt_f, fold), lambda i: (i, 0)),
        ),
        compiler_params=pltpu.CompilerParams(
            dimension_semantics=("parallel",),   # shards row tiles across v7x's 2 TCs
        ),
        cost_estimate=cost,
    )(xf, w1bd, b1t, w2bd, b2t, w3bd, b3s)

    # (rows_pad/fold, fold) flattens row-major straight back to logical row order.
    return out.reshape(rows_pad)[:rows].reshape(*lead_shape, 1)


def init_params(key, state_dim, embed_dim, dtype=jnp.float32):
    """Synthetic init matching nn.Linear's uniform(+-1/sqrt(fan_in)), natural layout."""
    ks = jax.random.split(key, 6)

    def lin(kw, kb, fan_in, fan_out):
        bound = float(1.0 / (fan_in ** 0.5))
        w = jax.random.uniform(kw, (fan_out, fan_in), dtype, -bound, bound)
        b = jax.random.uniform(kb, (fan_out,), dtype, -bound, bound)
        return w, b

    w1, b1 = lin(ks[0], ks[1], state_dim, embed_dim)
    w2, b2 = lin(ks[2], ks[3], embed_dim, embed_dim)
    w3, b3 = lin(ks[4], ks[5], embed_dim, 1)
    return (w1, b1, w2, b2, w3, b3)


def v_net_reference(states, params):
    w1, b1, w2, b2, w3, b3 = params
    h1 = jax.nn.relu(states @ w1.T + b1)
    h2 = jax.nn.relu(h1 @ w2.T + b2)
    return h2 @ w3.T + b3


if __name__ == "__main__":
    # Shapes consistent with QMIX usage: states (batch, seq, state_dim).
    batch, seq = 2, 8
    state_dim, embed_dim = 32, 32   # np.prod(args.state_shape), args.mixing_embed_dim

    key = jax.random.PRNGKey(0)
    k_state, k_param, k_state2 = jax.random.split(key, 3)

    states = jax.random.normal(k_state, (batch, seq, state_dim), dtype=jnp.float32)
    params = init_params(k_param, state_dim, embed_dim)

    v = jax.block_until_ready(v_net_forward(states, params))
    v_ref = v_net_reference(states, params)
    assert v.shape == (batch, seq, 1), v.shape
    # Tolerance covers MXU default-precision f32 matmul passes vs XLA reference.
    assert jnp.allclose(v, v_ref, atol=1e-3, rtol=1e-3), "f32 mismatch vs reference"

    # Multi-tile + padded path (rows not a multiple of fold or tile; 2 grid steps).
    states2 = jax.random.normal(k_state2, (3, 37, state_dim), dtype=jnp.float32)
    v2 = jax.block_until_ready(v_net_forward(states2, params))
    v2_ref = v_net_reference(states2, params)
    assert v2.shape == (3, 37, 1), v2.shape
    assert jnp.allclose(v2, v2_ref, atol=1e-3, rtol=1e-3), "multi-tile mismatch"

    # Optional bf16 input/weight path (f32 accumulation) -- looser tolerance.
    v_bf16 = jax.block_until_ready(
        v_net_forward(states, params, compute_dtype=jnp.bfloat16))
    assert jnp.allclose(v_bf16, v_ref, atol=1e-1, rtol=1e-1), "bf16 path mismatch"

    print("KERNEL_OK")
</pallas_src>

<mosaic_0001>
module attributes {stable_mosaic.version = 11 : i64} {
  func.func @vnet_kernel(%arg0: i32, %arg1: memref<8x128xf32, #tpu.memory_space<vmem>>, %arg2: memref<128x128xf32, #tpu.memory_space<vmem>>, %arg3: memref<1x128xf32, #tpu.memory_space<vmem>>, %arg4: memref<128x128xf32, #tpu.memory_space<vmem>>, %arg5: memref<1x128xf32, #tpu.memory_space<vmem>>, %arg6: memref<128x4xf32, #tpu.memory_space<vmem>>, %arg7: memref<1xf32, #tpu.memory_space<smem>>, %arg8: memref<8x4xf32, #tpu.memory_space<vmem>>) attributes {dimension_semantics = [#tpu.dimension_semantics<parallel>], iteration_bounds = array<i64: 1>, scalar_prefetch = 0 : i64, scratch_operands = 0 : i64, tpu.core_type = #tpu.core_type<tc>, window_params = [{transform_indices = @transform_0, window_bounds = array<i64: 8, 128>}, {pipeline_mode = #tpu.pipeline_mode<synchronous>, transform_indices = @transform_1, window_bounds = array<i64: 128, 128>}, {pipeline_mode = #tpu.pipeline_mode<synchronous>, transform_indices = @transform_2, window_bounds = array<i64: 1, 128>}, {pipeline_mode = #tpu.pipeline_mode<synchronous>, transform_indices = @transform_3, window_bounds = array<i64: 128, 128>}, {pipeline_mode = #tpu.pipeline_mode<synchronous>, transform_indices = @transform_4, window_bounds = array<i64: 1, 128>}, {pipeline_mode = #tpu.pipeline_mode<synchronous>, transform_indices = @transform_5, window_bounds = array<i64: 128, 4>}, {transform_indices = @transform_6, window_bounds = array<i64: 1>}, {transform_indices = @transform_7, window_bounds = array<i64: 8, 4>}]} {
    %c0 = arith.constant 0 : index
    %c0_0 = arith.constant 0 : index
    %0 = vector.load %arg1[%c0, %c0_0] : memref<8x128xf32, #tpu.memory_space<vmem>>, vector<8x128xf32>
    %c0_1 = arith.constant 0 : index
    %c0_2 = arith.constant 0 : index
    %1 = vector.load %arg2[%c0_1, %c0_2] : memref<128x128xf32, #tpu.memory_space<vmem>>, vector<128x128xf32>
    %cst = arith.constant dense<0.000000e+00> : vector<8x128xf32>
    %2 = tpu.matmul %0, %1, %cst {dimension_numbers = #tpu.dot_dimension_numbers<[1], [0], [0], [1], [0, 0, 1, 1], [], []>} : vector<8x128xf32>, vector<128x128xf32>, vector<8x128xf32> -> vector<8x128xf32>
    %c0_3 = arith.constant 0 : index
    %c0_4 = arith.constant 0 : index
    %3 = vector.load %arg3[%c0_3, %c0_4] : memref<1x128xf32, #tpu.memory_space<vmem>>, vector<1x128xf32>
    %4 = vector.broadcast %3 : vector<1x128xf32> to vector<8x128xf32>
    %5 = arith.addf %2, %4 : vector<8x128xf32>
    %cst_5 = arith.constant 0.000000e+00 : f32
    %6 = vector.broadcast %cst_5 : f32 to vector<8x128xf32>
    %7 = arith.maximumf %5, %6 : vector<8x128xf32>
    %c0_6 = arith.constant 0 : index
    %c0_7 = arith.constant 0 : index
    %8 = vector.load %arg4[%c0_6, %c0_7] : memref<128x128xf32, #tpu.memory_space<vmem>>, vector<128x128xf32>
    %cst_8 = arith.constant dense<0.000000e+00> : vector<8x128xf32>
    %9 = tpu.matmul %7, %8, %cst_8 {dimension_numbers = #tpu.dot_dimension_numbers<[1], [0], [0], [1], [0, 0, 1, 1], [], []>} : vector<8x128xf32>, vector<128x128xf32>, vector<8x128xf32> -> vector<8x128xf32>
    %c0_9 = arith.constant 0 : index
    %c0_10 = arith.constant 0 : index
    %10 = vector.load %arg5[%c0_9, %c0_10] : memref<1x128xf32, #tpu.memory_space<vmem>>, vector<1x128xf32>
    %11 = vector.broadcast %10 : vector<1x128xf32> to vector<8x128xf32>
    %12 = arith.addf %9, %11 : vector<8x128xf32>
    %cst_11 = arith.constant 0.000000e+00 : f32
    %13 = vector.broadcast %cst_11 : f32 to vector<8x128xf32>
    %14 = arith.maximumf %12, %13 : vector<8x128xf32>
    %c0_12 = arith.constant 0 : index
    %c0_13 = arith.constant 0 : index
    %15 = vector.load %arg6[%c0_12, %c0_13] : memref<128x4xf32, #tpu.memory_space<vmem>>, vector<128x4xf32>
    %cst_14 = arith.constant dense<0.000000e+00> : vector<8x4xf32>
    %16 = tpu.matmul %14, %15, %cst_14 {dimension_numbers = #tpu.dot_dimension_numbers<[1], [0], [0], [1], [0, 0, 1, 1], [], []>} : vector<8x128xf32>, vector<128x4xf32>, vector<8x4xf32> -> vector<8x4xf32>
    %c0_15 = arith.constant 0 : index
    %17 = memref.load %arg7[%c0_15] : memref<1xf32, #tpu.memory_space<smem>>
    %18 = vector.broadcast %17 : f32 to vector<8x4xf32>
    %19 = arith.addf %16, %18 : vector<8x4xf32>
    %c0_16 = arith.constant 0 : index
    %c0_17 = arith.constant 0 : index
    %20 = vector.load %arg8[%c0_16, %c0_17] : memref<8x4xf32, #tpu.memory_space<vmem>>, vector<8x4xf32>
    tpu.vector_store %arg8[%c0_16, %c0_17], %19 {strides = array<i32>} : memref<8x4xf32, #tpu.memory_space<vmem>>, vector<8x4xf32>,
    return
  }
  func.func @transform_0(%arg0: i32) -> (i32, i32) {
    %c0_i32 = arith.constant 0 : i32
    %c0_i32_0 = arith.constant 0 : i32
    return %arg0, %c0_i32 : i32, i32
  }
  func.func @transform_1(%arg0: i32) -> (i32, i32) {
    %c0_i32 = arith.constant 0 : i32
    %c0_i32_0 = arith.constant 0 : i32
    %c0_i32_1 = arith.constant 0 : i32
    return %c0_i32, %c0_i32_0 : i32, i32
  }
  func.func @transform_2(%arg0: i32) -> (i32, i32) {
    %c0_i32 = arith.constant 0 : i32
    %c0_i32_0 = arith.constant 0 : i32
    %c0_i32_1 = arith.constant 0 : i32
    return %c0_i32, %c0_i32_0 : i32, i32
  }
  func.func @transform_3(%arg0: i32) -> (i32, i32) {
    %c0_i32 = arith.constant 0 : i32
    %c0_i32_0 = arith.constant 0 : i32
    %c0_i32_1 = arith.constant 0 : i32
    return %c0_i32, %c0_i32_0 : i32, i32
  }
  func.func @transform_4(%arg0: i32) -> (i32, i32) {
    %c0_i32 = arith.constant 0 : i32
    %c0_i32_0 = arith.constant 0 : i32
    %c0_i32_1 = arith.constant 0 : i32
    return %c0_i32, %c0_i32_0 : i32, i32
  }
  func.func @transform_5(%arg0: i32) -> (i32, i32) {
    %c0_i32 = arith.constant 0 : i32
    %c0_i32_0 = arith.constant 0 : i32
    %c0_i32_1 = arith.constant 0 : i32
    return %c0_i32, %c0_i32_0 : i32, i32
  }
  func.func @transform_6(%arg0: i32) -> i32 {
    %c0_i32 = arith.constant 0 : i32
    %c0_i32_0 = arith.constant 0 : i32
    return %c0_i32 : i32
  }
  func.func @transform_7(%arg0: i32) -> (i32, i32) {
    %c0_i32 = arith.constant 0 : i32
    %c0_i32_0 = arith.constant 0 : i32
    return %arg0, %c0_i32 : i32, i32
  }
}

</mosaic_0001>

<llo_original>
// kernel: tpu_custom_call.1
$region0: #{tpu_custom_call.1}
  #allocation0 [shape = 'u32[]', space=smem, size = 0x4, offset = 0x4, fixed_abs, tag = 'smem constant byte address 0x4 - core index']
  #allocation1 [shape = 'u32[144,128]{1,0:T(1,128)}', space=vmem, size = 0x12000, scoped, tag = 'internal scratch']
  #allocation2 [shape = 'f32[1]{0:T(128)S(6)}', space=smem, size = 0x200, scoped, tag = 'scoped memory for tpu_custom_call.1']
  %s0 = inlined_call_operand.vmem [shape: f32[8,128], index: 0, kind: input, shape index: {}]
  %s1 = inlined_call_operand.vmem [shape: f32[128,128], index: 1, kind: input, shape index: {}]
  %s2 = inlined_call_operand.vmem [shape: f32[1,128], index: 2, kind: input, shape index: {}]
  %s3 = inlined_call_operand.hbm [shape: f32[128,128], index: 3, kind: input, shape index: {}]
  %s4 = inlined_call_operand.vmem [shape: f32[1,128], index: 4, kind: input, shape index: {}]
  %s5 = inlined_call_operand.vmem [shape: f32[128,4], index: 5, kind: input, shape index: {}]
  %s6 = inlined_call_operand.<no memory space> [shape: f32[1], index: 6, kind: input, shape index: {}]
  %s7 = inlined_call_operand.vmem [shape: f32[8,4], index: 7, kind: output, shape index: {}]
  %s8 = sld [smem:[#allocation0]]
  $region42: #{tpu_custom_call.1} parent=0
    _
  %s10 = ssub.s32 1, %s8
  %s11 = scalar_select 0, %s10, %s8
  %12 = sst [smem:[#allocation2]] %s6
  $region1: #{tpu_custom_call.1} parent=0
    #allocation3 [shape = 'u8[65536]{0}', space=vmem, size = 0x10000, scoped, tag = 'input window, operand 3, single buffered']
    #allocation4 [shape = 's32[1]{0}', space=sflag, size = 0x4, scoped, tag = 'scoped memory for tpu_custom_call.1']
    %13 = vsyncpa [#allocation4], 0
    // Predicated region
    $region2: #{tpu_custom_call.1} parent=1 // pred_check
      _
    $region3: #{tpu_custom_call.1} parent=1 // pred_check_branch
      %15 = sbr.rel (0) target = $region5
    $region4: #{tpu_custom_call.1} parent=1 // pred_region
      _
    $region5: #{tpu_custom_call.1} parent=1 // pred_fallthru
      _
    // Predicated region
    $region6: #{tpu_custom_call.1} parent=1 // pred_check
      _
    $region7: #{tpu_custom_call.1} parent=1 // pred_check_branch
      %17 = sbr.rel (0) target = $region9
    $region8: #{tpu_custom_call.1} parent=1 // pred_region
      _
    $region9: #{tpu_custom_call.1} parent=1 // pred_fallthru
      _
    // Predicated region
    $region10: #{tpu_custom_call.1} parent=1 // pred_check
      _
    $region11: #{tpu_custom_call.1} parent=1 // pred_check_branch
      %19 = sbr.rel (0) target = $region13
    $region12: #{tpu_custom_call.1} parent=1 // pred_region
      _
    $region13: #{tpu_custom_call.1} parent=1 // pred_fallthru
      _
    // Predicated region
    $region14: #{tpu_custom_call.1} parent=1 // pred_check
      _
    $region15: #{tpu_custom_call.1} parent=1 // pred_check_branch
      %21 = sbr.rel (0) target = $region17
    $region16: #{tpu_custom_call.1} parent=1 // pred_region
      %s23 = ssub.s32 2048, 2048
      %24 = vsyncadd [#allocation4], %s23
      %s25 = sshll.u32 [#allocation3], 4
      %s26 = int_to_ptr.vmem [resolvable:$true] %s25
      %31 = dma.hbm_to_vmem [thread:$0]  %s3, 2048, %s26, [#allocation4], 128, 128, 8
    $region17: #{tpu_custom_call.1} parent=1 // pred_fallthru
      _
    // Predicated region
    $region18: #{tpu_custom_call.1} parent=1 // pred_check
      _
    $region19: #{tpu_custom_call.1} parent=1 // pred_check_branch
      %33 = sbr.rel (0) target = $region21
    $region20: #{tpu_custom_call.1} parent=1 // pred_region
      _
    $region21: #{tpu_custom_call.1} parent=1 // pred_fallthru
      _
    // Predicated region
    $region22: #{tpu_custom_call.1} parent=1 // pred_check
      _
    $region23: #{tpu_custom_call.1} parent=1 // pred_check_branch
      %35 = sbr.rel (0) target = $region25
    $region24: #{tpu_custom_call.1} parent=1 // pred_region
      _
    $region25: #{tpu_custom_call.1} parent=1 // pred_fallthru
      _
    // Predicated region
    $region26: #{tpu_custom_call.1} parent=1 // pred_check
      _
    $region27: #{tpu_custom_call.1} parent=1 // pred_check_branch
      %37 = sbr.rel (0) target = $region29
    $region28: #{tpu_custom_call.1} parent=1 // pred_region
      _
    $region29: #{tpu_custom_call.1} parent=1 // pred_fallthru
      _
    // Predicated region
    $region30: #{tpu_custom_call.1} parent=1 // pred_check
      _
    $region31: #{tpu_custom_call.1} parent=1 // pred_check_branch
      %39 = sbr.rel (0) target = $region33
    $region32: #{tpu_custom_call.1} parent=1 // pred_region
      %40 = dma.done [#allocation4], 2048
    $region33: #{tpu_custom_call.1} parent=1 // pred_fallthru
      _
    %v41 = vld [vmem:[%s0] sm:$0xff]
    %v42 = vld [vmem:[%s1] sm:$0xff]
    %v43 = vld [vmem:[%s1 + $0x8] sm:$0xff]
    %v44 = vld [vmem:[%s1 + $0x10] sm:$0xff]
    %v45 = vld [vmem:[%s1 + $0x18] sm:$0xff]
    %v46 = vld [vmem:[%s1 + $0x20] sm:$0xff]
    %v47 = vld [vmem:[%s1 + $0x28] sm:$0xff]
    %v48 = vld [vmem:[%s1 + $0x30] sm:$0xff]
    %v49 = vld [vmem:[%s1 + $0x38] sm:$0xff]
    %v50 = vld [vmem:[%s1 + $0x40] sm:$0xff]
    %v51 = vld [vmem:[%s1 + $0x48] sm:$0xff]
    %v52 = vld [vmem:[%s1 + $0x50] sm:$0xff]
    %v53 = vld [vmem:[%s1 + $0x58] sm:$0xff]
    %v54 = vld [vmem:[%s1 + $0x60] sm:$0xff]
    %v55 = vld [vmem:[%s1 + $0x68] sm:$0xff]
    %v56 = vld [vmem:[%s1 + $0x70] sm:$0xff]
    %v57 = vld [vmem:[%s1 + $0x78] sm:$0xff]
    %v58 = vld [vmem:[%s2] sm:$0x1]
    %v60 = vlaneseq
    %v61 = vshrl.u32 %v60, 7
    %v62 = vsub.s32 0, %v61
    %v63 = vrot.slane %v58, %v62
    %65 = vmatprep.subr.mxu0 0.0
    %66 = vmatpush1.msra.mxu0 %v42
    %67 = vmatprep.subr.mxu0 0.0
    %68 = vmatpush1.msra.mxu0 %v43
    %69 = vmatprep.subr.mxu0 0.0
    %70 = vmatpush1.msra.mxu0 %v44
    %71 = vmatprep.subr.mxu0 0.0
    %72 = vmatpush1.msra.mxu0 %v45
    %73 = vmatprep.subr.mxu0 0.0
    %74 = vmatpush1.msra.mxu0 %v46
    %75 = vmatprep.subr.mxu0 0.0
    %76 = vmatpush1.msra.mxu0 %v47
    %77 = vmatprep.subr.mxu0 0.0
    %78 = vmatpush1.msra.mxu0 %v48
    %79 = vmatprep.subr.mxu0 0.0
    %80 = vmatpush1.msra.mxu0 %v49
    %81 = vmatprep.subr.mxu0 0.0
    %82 = vmatpush1.msra.mxu0 %v50
    %83 = vmatprep.subr.mxu0 0.0
    %84 = vmatpush1.msra.mxu0 %v51
    %85 = vmatprep.subr.mxu0 0.0
    %86 = vmatpush1.msra.mxu0 %v52
    %87 = vmatprep.subr.mxu0 0.0
    %88 = vmatpush1.msra.mxu0 %v53
    %89 = vmatprep.subr.mxu0 0.0
    %90 = vmatpush1.msra.mxu0 %v54
    %91 = vmatprep.subr.mxu0 0.0
    %92 = vmatpush1.msra.mxu0 %v55
    %93 = vmatprep.subr.mxu0 0.0
    %94 = vmatpush1.msra.mxu0 %v56
    %95 = vmatprep.subr.mxu0 0.0
    %96 = vmatpush1.msra.mxu0 %v57
    %97 = vmatprep.subr.mxu0 0.0
    %98 = vmatpush1.msra.mxu0 0.0
    %99 = vmatprep.subr.mxu0 0.0
    %100 = vmatpush1.msra.mxu0 0.0
    %101 = vmatprep.subr.mxu0 0.0
    %102 = vmatpush1.msra.mxu0 0.0
    %103 = vmatprep.subr.mxu0 0.0
    %104 = vmatpush1.msra.mxu0 0.0
    %105 = vmatprep.subr.mxu0 0.0
    %106 = vmatpush1.msra.mxu0 0.0
    %107 = vmatprep.subr.mxu0 0.0
    %108 = vmatpush1.msra.mxu0 0.0
    %109 = vmatprep.subr.mxu0 0.0
    %110 = vmatpush1.msra.mxu0 0.0
    %111 = vmatprep.subr.mxu0 0.0
    %112 = vmatpush1.msra.mxu0 0.0
    %113 = vmatprep.subr.mxu0 0.0
    %114 = vmatpush1.msra.mxu0 0.0
    %115 = vmatprep.subr.mxu0 0.0
    %116 = vmatpush1.msra.mxu0 0.0
    %117 = vmatprep.subr.mxu0 0.0
    %118 = vmatpush1.msra.mxu0 0.0
    %119 = vmatprep.subr.mxu0 0.0
    %120 = vmatpush1.msra.mxu0 0.0
    %121 = vmatprep.subr.mxu0 0.0
    %122 = vmatpush1.msra.mxu0 0.0
    %123 = vmatprep.subr.mxu0 0.0
    %124 = vmatpush1.msra.mxu0 0.0
    %125 = vmatprep.subr.mxu0 0.0
    %126 = vmatpush1.msra.mxu0 0.0
    %127 = vmatprep.subr.mxu0 0.0
    %128 = vmatpush1.msra.mxu0 0.0
    %129 = vmatprep.mubr.f32.mxu0 0.0
    %130 = vmatmul.mubr.f32.gmra.mrb[0].mxu0 %v41
    %v131 = vpop.f32.mrb[0].mxu0
    %v132 = vadd.f32 %v63, %v131
    %v133 = vpop.f32.mrb[0].mxu0
    %134 = vdwg.mxu0
    %v135 = vmax.f32 %v132, 0.0
    %v136 = vld [vmem:[#allocation3] sm:$0xff]
    %v137 = vld [vmem:[#allocation3 + $0x8] sm:$0xff]
    %v138 = vld [vmem:[#allocation3 + $0x10] sm:$0xff]
    %v139 = vld [vmem:[#allocation3 + $0x18] sm:$0xff]
    %v140 = vld [vmem:[#allocation3 + $0x20] sm:$0xff]
    %v141 = vld [vmem:[#allocation3 + $0x28] sm:$0xff]
    %v142 = vld [vmem:[#allocation3 + $0x30] sm:$0xff]
    %v143 = vld [vmem:[#allocation3 + $0x38] sm:$0xff]
    %v144 = vld [vmem:[#allocation3 + $0x40] sm:$0xff]
    %v145 = vld [vmem:[#allocation3 + $0x48] sm:$0xff]
    %v146 = vld [vmem:[#allocation3 + $0x50] sm:$0xff]
    %v147 = vld [vmem:[#allocation3 + $0x58] sm:$0xff]
    %v148 = vld [vmem:[#allocation3 + $0x60] sm:$0xff]
    %v149 = vld [vmem:[#allocation3 + $0x68] sm:$0xff]
    %v150 = vld [vmem:[#allocation3 + $0x70] sm:$0xff]
    %v151 = vld [vmem:[#allocation3 + $0x78] sm:$0xff]
    %v152 = vld [vmem:[%s4] sm:$0x1]
    %v154 = vlaneseq
    %v155 = vshrl.u32 %v154, 7
    %v156 = vsub.s32 0, %v155
    %v157 = vrot.slane %v152, %v156
    %159 = vmatprep.subr.mxu0 0.0
    %160 = vmatpush1.msra.mxu0 %v136
    %161 = vmatprep.subr.mxu0 0.0
    %162 = vmatpush1.msra.mxu0 %v137
    %163 = vmatprep.subr.mxu0 0.0
    %164 = vmatpush1.msra.mxu0 %v138
    %165 = vmatprep.subr.mxu0 0.0
    %166 = vmatpush1.msra.mxu0 %v139
    %167 = vmatprep.subr.mxu0 0.0
    %168 = vmatpush1.msra.mxu0 %v140
    %169 = vmatprep.subr.mxu0 0.0
    %170 = vmatpush1.msra.mxu0 %v141
    %171 = vmatprep.subr.mxu0 0.0
    %172 = vmatpush1.msra.mxu0 %v142
    %173 = vmatprep.subr.mxu0 0.0
    %174 = vmatpush1.msra.mxu0 %v143
    %175 = vmatprep.subr.mxu0 0.0
    %176 = vmatpush1.msra.mxu0 %v144
    %177 = vmatprep.subr.mxu0 0.0
    %178 = vmatpush1.msra.mxu0 %v145
    %179 = vmatprep.subr.mxu0 0.0
    %180 = vmatpush1.msra.mxu0 %v146
    %181 = vmatprep.subr.mxu0 0.0
    %182 = vmatpush1.msra.mxu0 %v147
    %183 = vmatprep.subr.mxu0 0.0
    %184 = vmatpush1.msra.mxu0 %v148
    %185 = vmatprep.subr.mxu0 0.0
    %186 = vmatpush1.msra.mxu0 %v149
    %187 = vmatprep.subr.mxu0 0.0
    %188 = vmatpush1.msra.mxu0 %v150
    %189 = vmatprep.subr.mxu0 0.0
    %190 = vmatpush1.msra.mxu0 %v151
    %191 = vmatprep.subr.mxu0 0.0
    %192 = vmatpush1.msra.mxu0 0.0
    %193 = vmatprep.subr.mxu0 0.0
    %194 = vmatpush1.msra.mxu0 0.0
    %195 = vmatprep.subr.mxu0 0.0
    %196 = vmatpush1.msra.mxu0 0.0
    %197 = vmatprep.subr.mxu0 0.0
    %198 = vmatpush1.msra.mxu0 0.0
    %199 = vmatprep.subr.mxu0 0.0
    %200 = vmatpush1.msra.mxu0 0.0
    %201 = vmatprep.subr.mxu0 0.0
    %202 = vmatpush1.msra.mxu0 0.0
    %203 = vmatprep.subr.mxu0 0.0
    %204 = vmatpush1.msra.mxu0 0.0
    %205 = vmatprep.subr.mxu0 0.0
    %206 = vmatpush1.msra.mxu0 0.0
    %207 = vmatprep.subr.mxu0 0.0
    %208 = vmatpush1.msra.mxu0 0.0
    %209 = vmatprep.subr.mxu0 0.0
    %210 = vmatpush1.msra.mxu0 0.0
    %211 = vmatprep.subr.mxu0 0.0
    %212 = vmatpush1.msra.mxu0 0.0
    %213 = vmatprep.subr.mxu0 0.0
    %214 = vmatpush1.msra.mxu0 0.0
    %215 = vmatprep.subr.mxu0 0.0
    %216 = vmatpush1.msra.mxu0 0.0
    %217 = vmatprep.subr.mxu0 0.0
    %218 = vmatpush1.msra.mxu0 0.0
    %219 = vmatprep.subr.mxu0 0.0
    %220 = vmatpush1.msra.mxu0 0.0
    %221 = vmatprep.subr.mxu0 0.0
    %222 = vmatpush1.msra.mxu0 0.0
    %223 = vmatprep.mubr.f32.mxu0 0.0
    %224 = vmatmul.mubr.f32.gmra.mrb[0].mxu0 %v135
    %v225 = vpop.f32.mrb[0].mxu0
    %v226 = vadd.f32 %v157, %v225
    %v227 = vpop.f32.mrb[0].mxu0
    %228 = vdwg.mxu0
    %v229 = vmax.f32 %v226, 0.0
    %v230 = vld [vmem:[%s5] sm:$0xff]
    %v231 = vld [vmem:[%s5 + $0x8] sm:$0xff]
    %v232 = vld [vmem:[%s5 + $0x10] sm:$0xff]
    %v233 = vld [vmem:[%s5 + $0x18] sm:$0xff]
    %v234 = vld [vmem:[%s5 + $0x20] sm:$0xff]
    %v235 = vld [vmem:[%s5 + $0x28] sm:$0xff]
    %v236 = vld [vmem:[%s5 + $0x30] sm:$0xff]
    %v237 = vld [vmem:[%s5 + $0x38] sm:$0xff]
    %v238 = vld [vmem:[%s5 + $0x40] sm:$0xff]
    %v239 = vld [vmem:[%s5 + $0x48] sm:$0xff]
    %v240 = vld [vmem:[%s5 + $0x50] sm:$0xff]
    %v241 = vld [vmem:[%s5 + $0x58] sm:$0xff]
    %v242 = vld [vmem:[%s5 + $0x60] sm:$0xff]
    %v243 = vld [vmem:[%s5 + $0x68] sm:$0xff]
    %v244 = vld [vmem:[%s5 + $0x70] sm:$0xff]
    %v245 = vld [vmem:[%s5 + $0x78] sm:$0xff]
    %s246 = sld [smem:[#allocation2]]
    %v247 = vstv %s246
    %248 = vmatprep.subr.mxu0 0.0
    %249 = vmatpush1.msra.mxu0 %v230
    %250 = vmatprep.subr.mxu0 0.0
    %251 = vmatpush1.msra.mxu0 %v231
    %252 = vmatprep.subr.mxu0 0.0
    %253 = vmatpush1.msra.mxu0 %v232
    %254 = vmatprep.subr.mxu0 0.0
    %255 = vmatpush1.msra.mxu0 %v233
    %256 = vmatprep.subr.mxu0 0.0
    %257 = vmatpush1.msra.mxu0 %v234
    %258 = vmatprep.subr.mxu0 0.0
    %259 = vmatpush1.msra.mxu0 %v235
    %260 = vmatprep.subr.mxu0 0.0
    %261 = vmatpush1.msra.mxu0 %v236
    %262 = vmatprep.subr.mxu0 0.0
    %263 = vmatpush1.msra.mxu0 %v237
    %264 = vmatprep.subr.mxu0 0.0
    %265 = vmatpush1.msra.mxu0 %v238
    %266 = vmatprep.subr.mxu0 0.0
    %267 = vmatpush1.msra.mxu0 %v239
    %268 = vmatprep.subr.mxu0 0.0
    %269 = vmatpush1.msra.mxu0 %v240
    %270 = vmatprep.subr.mxu0 0.0
    %271 = vmatpush1.msra.mxu0 %v241
    %272 = vmatprep.subr.mxu0 0.0
    %273 = vmatpush1.msra.mxu0 %v242
    %274 = vmatprep.subr.mxu0 0.0
    %275 = vmatpush1.msra.mxu0 %v243
    %276 = vmatprep.subr.mxu0 0.0
    %277 = vmatpush1.msra.mxu0 %v244
    %278 = vmatprep.subr.mxu0 0.0
    %279 = vmatpush1.msra.mxu0 %v245
    %280 = vmatprep.subr.mxu0 0.0
    %281 = vmatpush1.msra.mxu0 0.0
    %282 = vmatprep.subr.mxu0 0.0
    %283 = vmatpush1.msra.mxu0 0.0
    %284 = vmatprep.subr.mxu0 0.0
    %285 = vmatpush1.msra.mxu0 0.0
    %286 = vmatprep.subr.mxu0 0.0
    %287 = vmatpush1.msra.mxu0 0.0
    %288 = vmatprep.subr.mxu0 0.0
    %289 = vmatpush1.msra.mxu0 0.0
    %290 = vmatprep.subr.mxu0 0.0
    %291 = vmatpush1.msra.mxu0 0.0
    %292 = vmatprep.subr.mxu0 0.0
    %293 = vmatpush1.msra.mxu0 0.0
    %294 = vmatprep.subr.mxu0 0.0
    %295 = vmatpush1.msra.mxu0 0.0
    %296 = vmatprep.subr.mxu0 0.0
    %297 = vmatpush1.msra.mxu0 0.0
    %298 = vmatprep.subr.mxu0 0.0
    %299 = vmatpush1.msra.mxu0 0.0
    %300 = vmatprep.subr.mxu0 0.0
    %301 = vmatpush1.msra.mxu0 0.0
    %302 = vmatprep.subr.mxu0 0.0
    %303 = vmatpush1.msra.mxu0 0.0
    %304 = vmatprep.subr.mxu0 0.0
    %305 = vmatpush1.msra.mxu0 0.0
    %306 = vmatprep.subr.mxu0 0.0
    %307 = vmatpush1.msra.mxu0 0.0
    %308 = vmatprep.subr.mxu0 0.0
    %309 = vmatpush1.msra.mxu0 0.0
    %310 = vmatprep.subr.mxu0 0.0
    %311 = vmatpush1.msra.mxu0 0.0
    %312 = vmatprep.mubr.f32.mxu0 0.0
    %313 = vmatmul.mubr.f32.gmra.mrb[0].mxu0 %v229
    %v314 = vpop.f32.mrb[0].mxu0
    %v315 = vadd.f32 %v247, %v314
    %v316 = vpop.f32.mrb[0].mxu0
    %317 = vdwg.mxu0
    %vm318 = vcmask 31744
    %319 = vst.msk [vmem:[%s7] sm:$0xff] %vm318, %v315
    // Predicated region
    $region34: #{tpu_custom_call.1} parent=1 // pred_check
      _
    $region35: #{tpu_custom_call.1} parent=1 // pred_check_branch
      %321 = sbr.rel (0) target = $region37
    $region36: #{tpu_custom_call.1} parent=1 // pred_region
      _
    $region37: #{tpu_custom_call.1} parent=1 // pred_fallthru
      _
    // Predicated region
    $region38: #{tpu_custom_call.1} parent=1 // pred_check
      _
    $region39: #{tpu_custom_call.1} parent=1 // pred_check_branch
      %323 = sbr.rel (0) target = $region41
    $region40: #{tpu_custom_call.1} parent=1 // pred_region
      _
    $region41: #{tpu_custom_call.1} parent=1 // pred_fallthru
      _
    %324 = vsyncpa [#allocation4], 1

</llo_original>
